<compile_context>
chip_gen: v7x
topology: tpu7x:2x2x1
jax: 0.10.0
libtpu: 0.0.40
codegen_flags: <defaults>
</compile_context>

<pallas_src>
import jax
import jax.numpy as jnp
from jax.experimental import pallas as pl
from jax.experimental.pallas import tpu as pltpu


def _diou_partials_kernel(gi_ref, gj_ref, m1p_ref, m2_ref, out_ref):
    # gi_ref / gj_ref: (1, HW_pad) coordinate grids.
    # m1p_ref / m2_ref: (TB, HW_pad) blocks (native dtype, cast here).
    # out_ref: (1, 8, 128) partials tile; row 0 lanes 0..4 carry the scalars.
    m1 = jax.nn.sigmoid(m1p_ref[...].astype(jnp.float32))
    m2 = m2_ref[...].astype(jnp.float32)

    inter = m1 * m2
    # Two lane (XLU) reductions per block: intersection and union row-sums.
    s_in = jnp.sum(inter, axis=-1, keepdims=True)                 # (TB, 1)
    s_un = jnp.sum(m1 + m2 - inter, axis=-1, keepdims=True)       # (TB, 1)
    iou = s_in * pl.reciprocal(s_un + jnp.float32(1e-8), approx=False)
    p_iou = jnp.sum(iou)

    # Column sums (cheap sublane/VALU reduction), then dot against the grids:
    # sum_r sum_c m[r,c] * g[c]  ==  sum_c colsum(m)[c] * g[c].
    col_m1 = jnp.sum(m1, axis=0, keepdims=True)                   # (1, HW_pad)
    col_m2 = jnp.sum(m2, axis=0, keepdims=True)                   # (1, HW_pad)
    gi = gi_ref[...].astype(jnp.float32)
    gj = gj_ref[...].astype(jnp.float32)
    p_pi = jnp.sum(col_m1 * gi)
    p_pj = jnp.sum(col_m1 * gj)
    p_pgti = jnp.sum(col_m2 * gi)
    p_pgtj = jnp.sum(col_m2 * gj)

    # Full (8,128) output tile: unmasked store, one tile per grid step.
    sub = jax.lax.broadcasted_iota(jnp.int32, (1, 8, 128), 1)
    lane = jax.lax.broadcasted_iota(jnp.int32, (1, 8, 128), 2)
    row0 = sub == 0
    vec = jnp.zeros((1, 8, 128), jnp.float32)
    vec = jnp.where(row0 & (lane == 0), p_iou, vec)
    vec = jnp.where(row0 & (lane == 1), p_pi, vec)
    vec = jnp.where(row0 & (lane == 2), p_pj, vec)
    vec = jnp.where(row0 & (lane == 3), p_pgti, vec)
    vec = jnp.where(row0 & (lane == 4), p_pgtj, vec)
    out_ref[...] = vec


def _round_up(x, m):
    return ((x + m - 1) // m) * m


def _row_multiple(*dtypes):
    # Sublane packing: 8 rows for 4-byte, 16 for 2-byte, 32 for 1-byte dtypes.
    m = 8
    for dt in dtypes:
        m = max(m, 32 // max(1, jnp.dtype(dt).itemsize))
    return m


def pixelwise_diou_loss(m1_p, m2, *, max_block_rows=None):
    B, C, H, W = m1_p.shape
    BC, HW = B * C, H * W

    # Lane-dense layout: (B*C, H*W). Stream in native dtype (no wrapper upcast).
    m1p_r = jnp.reshape(m1_p, (BC, HW))
    m2_r = jnp.reshape(m2, (BC, HW))

    # Pad the minor dim to a multiple of 128 (full, unmasked lane vregs).
    # Padded logits -1e30 -> sigmoid == 0; mask 0 -> every contribution is 0.
    hw_pad = _round_up(HW, 128)
    if hw_pad > HW:
        m1p_r = jnp.pad(m1p_r, ((0, 0), (0, hw_pad - HW)),
                        constant_values=-1e30)
        m2_r = jnp.pad(m2_r, ((0, 0), (0, hw_pad - HW)), constant_values=0)

    # Block rows: multiple of the sublane-packing factor; total input bytes per
    # block capped at ~4 MiB (double-buffered + f32 temps stays well inside a
    # 32 MiB scoped VMEM limit, safe on v5e/v6e and v7x's 64 MiB VMEM).
    mult = _row_multiple(m1p_r.dtype, m2_r.dtype)
    bytes_per_row = hw_pad * (jnp.dtype(m1p_r.dtype).itemsize +
                              jnp.dtype(m2_r.dtype).itemsize)
    cap = max(mult, (((4 * 1024 * 1024) // bytes_per_row) // mult) * mult)
    tb = min(cap, _round_up(BC, mult))
    # Guarantee >= 2 grid steps whenever BC can be split: keeps both v7x
    # TensorCores busy via the "parallel" grid axis (near-free on v5e/v6e).
    if BC >= 2 * mult:
        tb = min(tb, _round_up(-(-BC // 2), mult))
    if max_block_rows is not None:
        tb = min(tb, max(mult, (max_block_rows // mult) * mult))
    bc_pad = _round_up(BC, tb)
    num_tiles = bc_pad // tb

    if bc_pad > BC:
        # Inert padded rows: sigmoid(-1e30)=0 and m2=0 -> every partial is 0.
        m1p_r = jnp.pad(m1p_r, ((0, bc_pad - BC), (0, 0)),
                        constant_values=-1e30)
        m2_r = jnp.pad(m2_r, ((0, bc_pad - BC), (0, 0)), constant_values=0)

    # Exact coordinate grids (torch.linspace(0, H, steps=H): value = k*H/(H-1)),
    # computed once with integer arithmetic and passed as tiny constant inputs.
    scale_i = float(H) / float(H - 1) if H > 1 else 0.0
    scale_j = float(W) / float(W - 1) if W > 1 else 0.0
    idx = jnp.arange(hw_pad, dtype=jnp.int32)
    valid = idx < HW
    gi = jnp.where(valid, (idx // W).astype(jnp.float32) * scale_i, 0.0)
    gj = jnp.where(valid, (idx % W).astype(jnp.float32) * scale_j, 0.0)
    gi = gi.reshape(1, hw_pad)
    gj = gj.reshape(1, hw_pad)

    partials = pl.pallas_call(
        _diou_partials_kernel,
        out_shape=jax.ShapeDtypeStruct((num_tiles, 8, 128), jnp.float32),
        grid_spec=pltpu.PrefetchScalarGridSpec(
            num_scalar_prefetch=0,
            grid=(num_tiles,),
            in_specs=[
                pl.BlockSpec((1, hw_pad), lambda i: (0, 0)),   # grid_i (flat)
                pl.BlockSpec((1, hw_pad), lambda i: (0, 0)),   # grid_j (flat)
                pl.BlockSpec((tb, hw_pad), lambda i: (i, 0)),  # logits
                pl.BlockSpec((tb, hw_pad), lambda i: (i, 0)),  # target mask
            ],
            out_specs=pl.BlockSpec((1, 8, 128), lambda i: (i, 0, 0)),
        ),
        compiler_params=pltpu.CompilerParams(
            dimension_semantics=("parallel",),
            vmem_limit_bytes=32 * 1024 * 1024,
        ),
    )(gi, gj, m1p_r, m2_r)

    # Tiny finalize in the wrapper (a handful of scalar ops).
    sums = jnp.sum(partials[:, 0, :5], axis=0)
    inv_bc = 1.0 / BC
    inv_n = 1.0 / (BC * H * W)
    s = 1.0 - sums[0] * inv_bc
    c_i = sums[1] * inv_n
    c_j = sums[2] * inv_n
    g_c_i = sums[3] * inv_n
    g_c_j = sums[4] * inv_n
    d = ((c_i - g_c_i) ** 2 + (c_j - g_c_j) ** 2) / float(H * H + W * W)
    return s + d


def _reference_loss(m1_p, m2):
    """Pure-JAX port of the PyTorch forward, for verification."""
    B, C, H, W = m1_p.shape
    m1 = jax.nn.sigmoid(m1_p)
    inter = m1 * m2
    union = m1 + m2 - inter
    i_sum = jnp.sum(inter, axis=(2, 3))
    u_sum = jnp.sum(union, axis=(2, 3))
    iou = i_sum / (u_sum + 1e-8)
    s = 1.0 - jnp.mean(iou)
    ind_i = jnp.linspace(0.0, float(H), H, dtype=jnp.float32)
    ind_j = jnp.linspace(0.0, float(W), W, dtype=jnp.float32)
    gi = jnp.broadcast_to(ind_i[:, None], (H, W))
    gj = jnp.broadcast_to(ind_j[None, :], (H, W))
    c_i = jnp.mean(m1 * gi)
    c_j = jnp.mean(m1 * gj)
    g_c_i = jnp.mean(m2 * gi)
    g_c_j = jnp.mean(m2 * gj)
    d = ((c_i - g_c_i) ** 2 + (c_j - g_c_j) ** 2) / (H ** 2 + W ** 2)
    return s + d


if __name__ == "__main__":
    key = jax.random.PRNGKey(0)
    k1, k2, k3, k4, k5, k6 = jax.random.split(key, 6)

    # Primary shape (matches the module's NCHW usage).
    B, C, H, W = 2, 4, 16, 16
    m1_p = jax.random.normal(k1, (B, C, H, W), dtype=jnp.float32)      # logits
    m2 = jax.random.bernoulli(k2, 0.3, (B, C, H, W)).astype(jnp.float32)
    loss = pixelwise_diou_loss(m1_p, m2)
    jax.block_until_ready(loss)
    ref = _reference_loss(m1_p, m2)
    assert jnp.allclose(loss, ref, rtol=1e-5, atol=1e-5), (loss, ref)

    # Odd shape: exercises lane padding (480 -> 512) and row padding (9 -> 16).
    B2, C2, H2, W2 = 3, 3, 20, 24
    m1_p2 = jax.random.normal(k3, (B2, C2, H2, W2), dtype=jnp.float32)
    m2_2 = jax.random.bernoulli(k4, 0.4, (B2, C2, H2, W2)).astype(jnp.float32)
    loss2 = pixelwise_diou_loss(m1_p2, m2_2)
    jax.block_until_ready(loss2)
    ref2 = _reference_loss(m1_p2, m2_2)
    assert jnp.allclose(loss2, ref2, rtol=1e-5, atol=1e-5), (loss2, ref2)

    # Multi-tile grid: forces >1 "parallel" grid step plus row padding.
    loss3 = pixelwise_diou_loss(m1_p2, m2_2, max_block_rows=8)
    jax.block_until_ready(loss3)
    assert jnp.allclose(loss3, ref2, rtol=1e-5, atol=1e-5), (loss3, ref2)

    # Larger BC in bf16: exercises the no-upcast streaming path and the
    # automatic >= 2-tile split for megacore.
    B3, C3, H3, W3 = 4, 16, 16, 16
    m1_p3 = jax.random.normal(k5, (B3, C3, H3, W3), dtype=jnp.bfloat16)
    m2_3 = jax.random.bernoulli(k6, 0.3, (B3, C3, H3, W3)).astype(jnp.bfloat16)
    loss4 = pixelwise_diou_loss(m1_p3, m2_3)
    jax.block_until_ready(loss4)
    ref4 = _reference_loss(m1_p3.astype(jnp.float32), m2_3.astype(jnp.float32))
    assert jnp.allclose(loss4, ref4, rtol=1e-4, atol=1e-4), (loss4, ref4)

    print("KERNEL_OK")
</pallas_src>

<mosaic_0001>
module attributes {stable_mosaic.version = 11 : i64} {
  func.func @_diou_partials_kernel(%arg0: i32, %arg1: memref<1x256xf32, #tpu.memory_space<vmem>>, %arg2: memref<1x256xf32, #tpu.memory_space<vmem>>, %arg3: memref<8x256xf32, #tpu.memory_space<vmem>>, %arg4: memref<8x256xf32, #tpu.memory_space<vmem>>, %arg5: memref<1x8x128xf32, #tpu.memory_space<vmem>>) attributes {dimension_semantics = [#tpu.dimension_semantics<parallel>], iteration_bounds = array<i64: 1>, scalar_prefetch = 0 : i64, scratch_operands = 0 : i64, tpu.core_type = #tpu.core_type<tc>, window_params = [{pipeline_mode = #tpu.pipeline_mode<synchronous>, transform_indices = @transform_0, window_bounds = array<i64: 1, 256>}, {pipeline_mode = #tpu.pipeline_mode<synchronous>, transform_indices = @transform_1, window_bounds = array<i64: 1, 256>}, {transform_indices = @transform_2, window_bounds = array<i64: 8, 256>}, {transform_indices = @transform_3, window_bounds = array<i64: 8, 256>}, {transform_indices = @transform_4, window_bounds = array<i64: 1, 8, 128>}]} {
    %c0 = arith.constant 0 : index
    %c0_0 = arith.constant 0 : index
    %0 = vector.load %arg3[%c0, %c0_0] : memref<8x256xf32, #tpu.memory_space<vmem>>, vector<8x256xf32>
    %1 = arith.negf %0 : vector<8x256xf32>
    %2 = math.exp %1 : vector<8x256xf32>
    %cst = arith.constant 1.000000e+00 : f32
    %3 = vector.broadcast %cst : f32 to vector<8x256xf32>
    %4 = arith.addf %3, %2 : vector<8x256xf32>
    %5 = arith.divf %3, %4 : vector<8x256xf32>
    %c0_1 = arith.constant 0 : index
    %c0_2 = arith.constant 0 : index
    %6 = vector.load %arg4[%c0_1, %c0_2] : memref<8x256xf32, #tpu.memory_space<vmem>>, vector<8x256xf32>
    %7 = arith.mulf %5, %6 : vector<8x256xf32>
    %cst_3 = arith.constant dense<0.000000e+00> : vector<8xf32>
    %8 = vector.multi_reduction <add>, %7, %cst_3 [1] : vector<8x256xf32> to vector<8xf32>
    %9 = vector.shape_cast %8 : vector<8xf32> to vector<8x1xf32>
    %10 = arith.addf %5, %6 : vector<8x256xf32>
    %11 = arith.subf %10, %7 : vector<8x256xf32>
    %cst_4 = arith.constant dense<0.000000e+00> : vector<8xf32>
    %12 = vector.multi_reduction <add>, %11, %cst_4 [1] : vector<8x256xf32> to vector<8xf32>
    %13 = vector.shape_cast %12 : vector<8xf32> to vector<8x1xf32>
    %cst_5 = arith.constant 9.99999993E-9 : f32
    %14 = vector.broadcast %cst_5 : f32 to vector<8x1xf32>
    %15 = arith.addf %13, %14 : vector<8x1xf32>
    %16 = tpu.reciprocal %15 : vector<8x1xf32> -> vector<8x1xf32>
    %17 = arith.mulf %9, %16 : vector<8x1xf32>
    %18 = vector.shape_cast %17 : vector<8x1xf32> to vector<1x8x1xf32>
    %cst_6 = arith.constant dense<0.000000e+00> : vector<1xf32>
    %19 = vector.multi_reduction <add>, %18, %cst_6 [1, 2] : vector<1x8x1xf32> to vector<1xf32>
    %20 = vector.shape_cast %19 : vector<1xf32> to vector<1x1x1xf32>
    %21 = vector.extract %20[0, 0, 0] : f32 from vector<1x1x1xf32>
    %cst_7 = arith.constant dense<0.000000e+00> : vector<256xf32>
    %22 = vector.multi_reduction <add>, %5, %cst_7 [0] : vector<8x256xf32> to vector<256xf32>
    %23 = vector.shape_cast %22 : vector<256xf32> to vector<1x256xf32>
    %cst_8 = arith.constant dense<0.000000e+00> : vector<256xf32>
    %24 = vector.multi_reduction <add>, %6, %cst_8 [0] : vector<8x256xf32> to vector<256xf32>
    %25 = vector.shape_cast %24 : vector<256xf32> to vector<1x256xf32>
    %c0_9 = arith.constant 0 : index
    %c0_10 = arith.constant 0 : index
    %26 = vector.load %arg1[%c0_9, %c0_10] : memref<1x256xf32, #tpu.memory_space<vmem>>, vector<1x256xf32>
    %c0_11 = arith.constant 0 : index
    %c0_12 = arith.constant 0 : index
    %27 = vector.load %arg2[%c0_11, %c0_12] : memref<1x256xf32, #tpu.memory_space<vmem>>, vector<1x256xf32>
    %28 = arith.mulf %23, %26 : vector<1x256xf32>
    %29 = vector.shape_cast %28 : vector<1x256xf32> to vector<1x1x256xf32>
    %cst_13 = arith.constant dense<0.000000e+00> : vector<1xf32>
    %30 = vector.multi_reduction <add>, %29, %cst_13 [1, 2] : vector<1x1x256xf32> to vector<1xf32>
    %31 = vector.shape_cast %30 : vector<1xf32> to vector<1x1x1xf32>
    %32 = vector.extract %31[0, 0, 0] : f32 from vector<1x1x1xf32>
    %33 = arith.mulf %23, %27 : vector<1x256xf32>
    %34 = vector.shape_cast %33 : vector<1x256xf32> to vector<1x1x256xf32>
    %cst_14 = arith.constant dense<0.000000e+00> : vector<1xf32>
    %35 = vector.multi_reduction <add>, %34, %cst_14 [1, 2] : vector<1x1x256xf32> to vector<1xf32>
    %36 = vector.shape_cast %35 : vector<1xf32> to vector<1x1x1xf32>
    %37 = vector.extract %36[0, 0, 0] : f32 from vector<1x1x1xf32>
    %38 = arith.mulf %25, %26 : vector<1x256xf32>
    %39 = vector.shape_cast %38 : vector<1x256xf32> to vector<1x1x256xf32>
    %cst_15 = arith.constant dense<0.000000e+00> : vector<1xf32>
    %40 = vector.multi_reduction <add>, %39, %cst_15 [1, 2] : vector<1x1x256xf32> to vector<1xf32>
    %41 = vector.shape_cast %40 : vector<1xf32> to vector<1x1x1xf32>
    %42 = vector.extract %41[0, 0, 0] : f32 from vector<1x1x1xf32>
    %43 = arith.mulf %25, %27 : vector<1x256xf32>
    %44 = vector.shape_cast %43 : vector<1x256xf32> to vector<1x1x256xf32>
    %cst_16 = arith.constant dense<0.000000e+00> : vector<1xf32>
    %45 = vector.multi_reduction <add>, %44, %cst_16 [1, 2] : vector<1x1x256xf32> to vector<1xf32>
    %46 = vector.shape_cast %45 : vector<1xf32> to vector<1x1x1xf32>
    %47 = vector.extract %46[0, 0, 0] : f32 from vector<1x1x1xf32>
    %48 = tpu.iota {dimensions = array<i32: 1>} : vector<1x8x128xi32>
    %49 = tpu.iota {dimensions = array<i32: 2>} : vector<1x8x128xi32>
    %c0_i32 = arith.constant 0 : i32
    %50 = vector.broadcast %c0_i32 : i32 to vector<1x8x128xi32>
    %51 = arith.cmpi eq, %48, %50 : vector<1x8x128xi32>
    %cst_17 = arith.constant 0.000000e+00 : f32
    %52 = vector.broadcast %cst_17 : f32 to vector<1x8x128xf32>
    %c0_i32_18 = arith.constant 0 : i32
    %53 = vector.broadcast %c0_i32_18 : i32 to vector<1x8x128xi32>
    %54 = arith.cmpi eq, %49, %53 : vector<1x8x128xi32>
    %55 = arith.andi %51, %54 : vector<1x8x128xi1>
    %56 = vector.broadcast %21 : f32 to vector<1x8x128xf32>
    %57 = arith.select %55, %56, %52 : vector<1x8x128xi1>, vector<1x8x128xf32>
    %c1_i32 = arith.constant 1 : i32
    %58 = vector.broadcast %c1_i32 : i32 to vector<1x8x128xi32>
    %59 = arith.cmpi eq, %49, %58 : vector<1x8x128xi32>
    %60 = arith.andi %51, %59 : vector<1x8x128xi1>
    %61 = vector.broadcast %32 : f32 to vector<1x8x128xf32>
    %62 = arith.select %60, %61, %57 : vector<1x8x128xi1>, vector<1x8x128xf32>
    %c2_i32 = arith.constant 2 : i32
    %63 = vector.broadcast %c2_i32 : i32 to vector<1x8x128xi32>
    %64 = arith.cmpi eq, %49, %63 : vector<1x8x128xi32>
    %65 = arith.andi %51, %64 : vector<1x8x128xi1>
    %66 = vector.broadcast %37 : f32 to vector<1x8x128xf32>
    %67 = arith.select %65, %66, %62 : vector<1x8x128xi1>, vector<1x8x128xf32>
    %c3_i32 = arith.constant 3 : i32
    %68 = vector.broadcast %c3_i32 : i32 to vector<1x8x128xi32>
    %69 = arith.cmpi eq, %49, %68 : vector<1x8x128xi32>
    %70 = arith.andi %51, %69 : vector<1x8x128xi1>
    %71 = vector.broadcast %42 : f32 to vector<1x8x128xf32>
    %72 = arith.select %70, %71, %67 : vector<1x8x128xi1>, vector<1x8x128xf32>
    %c4_i32 = arith.constant 4 : i32
    %73 = vector.broadcast %c4_i32 : i32 to vector<1x8x128xi32>
    %74 = arith.cmpi eq, %49, %73 : vector<1x8x128xi32>
    %75 = arith.andi %51, %74 : vector<1x8x128xi1>
    %76 = vector.broadcast %47 : f32 to vector<1x8x128xf32>
    %77 = arith.select %75, %76, %72 : vector<1x8x128xi1>, vector<1x8x128xf32>
    %c0_19 = arith.constant 0 : index
    %c0_20 = arith.constant 0 : index
    %c0_21 = arith.constant 0 : index
    %78 = vector.load %arg5[%c0_19, %c0_20, %c0_21] : memref<1x8x128xf32, #tpu.memory_space<vmem>>, vector<1x8x128xf32>
    tpu.vector_store %arg5[%c0_19, %c0_20, %c0_21], %77 {strides = array<i32>} : memref<1x8x128xf32, #tpu.memory_space<vmem>>, vector<1x8x128xf32>,
    return
  }
  func.func @transform_0(%arg0: i32) -> (i32, i32) {
    %c0_i32 = arith.constant 0 : i32
    %c0_i32_0 = arith.constant 0 : i32
    %c0_i32_1 = arith.constant 0 : i32
    return %c0_i32, %c0_i32_0 : i32, i32
  }
  func.func @transform_1(%arg0: i32) -> (i32, i32) {
    %c0_i32 = arith.constant 0 : i32
    %c0_i32_0 = arith.constant 0 : i32
    %c0_i32_1 = arith.constant 0 : i32
    return %c0_i32, %c0_i32_0 : i32, i32
  }
  func.func @transform_2(%arg0: i32) -> (i32, i32) {
    %c0_i32 = arith.constant 0 : i32
    %c0_i32_0 = arith.constant 0 : i32
    return %arg0, %c0_i32 : i32, i32
  }
  func.func @transform_3(%arg0: i32) -> (i32, i32) {
    %c0_i32 = arith.constant 0 : i32
    %c0_i32_0 = arith.constant 0 : i32
    return %arg0, %c0_i32 : i32, i32
  }
  func.func @transform_4(%arg0: i32) -> (i32, i32, i32) {
    %c0_i32 = arith.constant 0 : i32
    %c0_i32_0 = arith.constant 0 : i32
    %c0_i32_1 = arith.constant 0 : i32
    return %arg0, %c0_i32, %c0_i32_0 : i32, i32, i32
  }
}

</mosaic_0001>

<llo_original>
// kernel: tpu_custom_call.1
$region0: #{tpu_custom_call.1}
  #allocation0 [shape = 'u32[]', space=smem, size = 0x4, offset = 0x4, fixed_abs, tag = 'smem constant byte address 0x4 - core index']
  #allocation1 [shape = 'u32[144,128]{1,0:T(1,128)}', space=vmem, size = 0x12000, scoped, tag = 'internal scratch']
  %s0 = inlined_call_operand.hbm [shape: f32[1,256], index: 0, kind: input, shape index: {}]
  %s1 = inlined_call_operand.vmem [shape: f32[1,256], index: 1, kind: input, shape index: {}]
  %s2 = inlined_call_operand.hbm [shape: f32[8,256], index: 2, kind: input, shape index: {}]
  %s3 = inlined_call_operand.hbm [shape: f32[8,256], index: 3, kind: input, shape index: {}]
  %s4 = inlined_call_operand.hbm [shape: f32[1,8,128], index: 4, kind: output, shape index: {}]
  %s5 = sld [smem:[#allocation0]]
  $region38: #{tpu_custom_call.1} parent=0
    _
  %s7 = ssub.s32 1, %s5
  %s8 = scalar_select 0, %s7, %s5
  $region1: #{tpu_custom_call.1} parent=0
    #allocation2 [shape = 'u8[1024]{0}', space=vmem, size = 0x400, scoped, tag = 'input window, operand 0, single buffered']
    #allocation3 [shape = 's32[1]{0}', space=sflag, size = 0x4, scoped, tag = 'scoped memory for tpu_custom_call.1']
    #allocation4 [shape = 's32[1]{0}', space=sflag, size = 0x4, scoped, tag = 'scoped memory for tpu_custom_call.1']
    #allocation5 [shape = 'u8[8192]{0}', space=vmem, size = 0x2000, scoped, tag = 'input window, operand 2, single buffered']
    #allocation6 [shape = 's32[1]{0}', space=sflag, size = 0x4, scoped, tag = 'scoped memory for tpu_custom_call.1']
    #allocation7 [shape = 'u8[8192]{0}', space=vmem, size = 0x2000, scoped, tag = 'input window, operand 3, single buffered']
    #allocation8 [shape = 'u8[4096]{0}', space=vmem, size = 0x1000, scoped, tag = 'output window, operand 0, single buffered']
    %9 = vsyncpa [#allocation3], 0
    %10 = vsyncpa [#allocation6], 0
    %11 = vsyncpa [#allocation4], 0
    // Predicated region
    $region2: #{tpu_custom_call.1} parent=1 // pred_check
      _
    $region3: #{tpu_custom_call.1} parent=1 // pred_check_branch
      %13 = sbr.rel (0) target = $region5
    $region4: #{tpu_custom_call.1} parent=1 // pred_region
      %s15 = ssub.s32 32, 32
      %16 = vsyncadd [#allocation3], %s15
      %s18 = sshll.u32 [#allocation2], 4
      %s19 = int_to_ptr.vmem [resolvable:$true] %s18
      %21 = dma.hbm_to_vmem [thread:$0]  %s0, 32, %s19, [#allocation3]
    $region5: #{tpu_custom_call.1} parent=1 // pred_fallthru
      _
    // Predicated region
    $region6: #{tpu_custom_call.1} parent=1 // pred_check
      _
    $region7: #{tpu_custom_call.1} parent=1 // pred_check_branch
      %23 = sbr.rel (0) target = $region9
    $region8: #{tpu_custom_call.1} parent=1 // pred_region
      _
    $region9: #{tpu_custom_call.1} parent=1 // pred_fallthru
      _
    // Predicated region
    $region10: #{tpu_custom_call.1} parent=1 // pred_check
      _
    $region11: #{tpu_custom_call.1} parent=1 // pred_check_branch
      %25 = sbr.rel (0) target = $region13
    $region12: #{tpu_custom_call.1} parent=1 // pred_region
      %s27 = ssub.s32 256, 256
      %28 = vsyncadd [#allocation6], %s27
      %s30 = sshll.u32 [#allocation5], 4
      %s31 = int_to_ptr.vmem [resolvable:$true] %s30
      %33 = dma.hbm_to_vmem [thread:$0]  %s2, 256, %s31, [#allocation6]
    $region13: #{tpu_custom_call.1} parent=1 // pred_fallthru
      _
    // Predicated region
    $region14: #{tpu_custom_call.1} parent=1 // pred_check
      _
    $region15: #{tpu_custom_call.1} parent=1 // pred_check_branch
      %35 = sbr.rel (0) target = $region17
    $region16: #{tpu_custom_call.1} parent=1 // pred_region
      %s37 = ssub.s32 256, 256
      %38 = vsyncadd [#allocation6], %s37
      %s40 = sshll.u32 [#allocation7], 4
      %s41 = int_to_ptr.vmem [resolvable:$true] %s40
      %43 = dma.hbm_to_vmem [thread:$0]  %s3, 256, %s41, [#allocation6]
    $region17: #{tpu_custom_call.1} parent=1 // pred_fallthru
      _
    // Predicated region
    $region18: #{tpu_custom_call.1} parent=1 // pred_check
      _
    $region19: #{tpu_custom_call.1} parent=1 // pred_check_branch
      %45 = sbr.rel (0) target = $region21
    $region20: #{tpu_custom_call.1} parent=1 // pred_region
      %46 = dma.done [#allocation3], 32
    $region21: #{tpu_custom_call.1} parent=1 // pred_fallthru
      _
    // Predicated region
    $region22: #{tpu_custom_call.1} parent=1 // pred_check
      _
    $region23: #{tpu_custom_call.1} parent=1 // pred_check_branch
      %48 = sbr.rel (0) target = $region25
    $region24: #{tpu_custom_call.1} parent=1 // pred_region
      %49 = dma.done [#allocation6], 256
    $region25: #{tpu_custom_call.1} parent=1 // pred_fallthru
      _
    // Predicated region
    $region26: #{tpu_custom_call.1} parent=1 // pred_check
      _
    $region27: #{tpu_custom_call.1} parent=1 // pred_check_branch
      %51 = sbr.rel (0) target = $region29
    $region28: #{tpu_custom_call.1} parent=1 // pred_region
      %52 = dma.done [#allocation6], 256
    $region29: #{tpu_custom_call.1} parent=1 // pred_fallthru
      _
    %v53 = vld [vmem:[#allocation5] sm:$0xff]
    %v54 = vld [vmem:[#allocation5 + $0x8] sm:$0xff]
    %v55 = vxor.u32 %v53, 2147483648
    %v56 = vxor.u32 %v54, 2147483648
    %v57 = vmul.f32 %v55, 1.442695
    %v58 = vpow.pop %v57
    %v59 = vmul.f32 %v56, 1.442695
    %v60 = vpow.pop %v59
    %v61 = vadd.f32 %v58, 1.0
    %v62 = vadd.f32 %v60, 1.0
    %v63 = vrcp.pop %v61
    %v64 = vmul.f32 1.0, %v63
    %v65 = vrcp.pop %v62
    %v66 = vmul.f32 1.0, %v65
    %v67 = vld [vmem:[#allocation7] sm:$0xff]
    %v68 = vld [vmem:[#allocation7 + $0x8] sm:$0xff]
    %v69 = vmul.f32 %v64, %v67
    %v70 = vmul.f32 %v66, %v68
    %v71 = vadd.f32 %v69, %v70
    %72 = vadd.xlane.f32.xlu0 %v71
    %v73 = vpop.xlane.xlu0 %72
    %v74 = vadd.f32 %v64, %v67
    %v75 = vadd.f32 %v66, %v68
    %v76 = vsub.f32 %v74, %v69
    %v77 = vsub.f32 %v75, %v70
    %v78 = vadd.f32 %v76, %v77
    %79 = vadd.xlane.f32.xlu0 %v78
    %v80 = vpop.xlane.xlu0 %79
    %v81 = vadd.f32 %v80, 1e-08
    %v82 = vrcp.pop %v81
    %v83 = vmul.f32 %v73, %v82
    %vm84 = vcmask 7168
    %v85 = vsel %vm84, %v83, 0.0
    %86 = vadd.xlane.f32.xlu0 %v85
    %v87 = vpop.xlane.xlu0 %86
    %v88 = vrot.slane %v87, 4
    %v89 = vadd.f32 %v87, %v88
    %v90 = vrot.slane %v89, 2
    %v91 = vadd.f32 %v89, %v90
    %v92 = vrot.slane %v91, 1
    %v93 = vadd.f32 %v91, %v92
    %s94 = vtos %v93
    %v95 = vrot.slane %v64, 4
    %v96 = vadd.f32 %v64, %v95
    %v97 = vrot.slane %v96, 2
    %v98 = vadd.f32 %v96, %v97
    %v99 = vrot.slane %v98, 1
    %v100 = vadd.f32 %v98, %v99
    %v101 = vrot.slane %v66, 4
    %v102 = vadd.f32 %v66, %v101
    %v103 = vrot.slane %v102, 2
    %v104 = vadd.f32 %v102, %v103
    %v105 = vrot.slane %v104, 1
    %v106 = vadd.f32 %v104, %v105
    %v107 = vrot.slane %v67, 4
    %v108 = vadd.f32 %v67, %v107
    %v109 = vrot.slane %v108, 2
    %v110 = vadd.f32 %v108, %v109
    %v111 = vrot.slane %v110, 1
    %v112 = vadd.f32 %v110, %v111
    %v113 = vrot.slane %v68, 4
    %v114 = vadd.f32 %v68, %v113
    %v115 = vrot.slane %v114, 2
    %v116 = vadd.f32 %v114, %v115
    %v117 = vrot.slane %v116, 1
    %v118 = vadd.f32 %v116, %v117
    %v119 = vld [vmem:[#allocation2] sm:$0x3]
    %v120 = vld [vmem:[%s1] sm:$0x3]
    %v122 = vlaneseq
    %v123 = vshrl.u32 %v122, 7
    %v124 = vsub.s32 0, %v123
    %v125 = vrot.slane %v119, %v124
    %v126 = vlaneseq
    %v127 = vshrl.u32 %v126, 7
    %v128 = vsub.s32 1, %v127
    %v129 = vrot.slane %v119, %v128
    %v132 = vmul.f32 %v100, %v125
    %v133 = vmul.f32 %v106, %v129
    %vm134 = vcmask 1040384
    %v135 = vsel %vm134, %v132, 0.0
    %v136 = vsel %vm134, %v133, 0.0
    %v137 = vadd.f32 %v135, %v136
    %138 = vadd.xlane.f32.xlu0 %v137
    %v139 = vpop.xlane.xlu0 %138
    %v140 = vrot.slane %v139, 4
    %v141 = vadd.f32 %v139, %v140
    %v142 = vrot.slane %v141, 2
    %v143 = vadd.f32 %v141, %v142
    %v144 = vrot.slane %v143, 1
    %v145 = vadd.f32 %v143, %v144
    %s146 = vtos %v145
    %v148 = vlaneseq
    %v149 = vshrl.u32 %v148, 7
    %v150 = vsub.s32 0, %v149
    %v151 = vrot.slane %v120, %v150
    %v152 = vlaneseq
    %v153 = vshrl.u32 %v152, 7
    %v154 = vsub.s32 1, %v153
    %v155 = vrot.slane %v120, %v154
    %v158 = vmul.f32 %v100, %v151
    %v159 = vmul.f32 %v106, %v155
    %v160 = vsel %vm134, %v158, 0.0
    %v161 = vsel %vm134, %v159, 0.0
    %v162 = vadd.f32 %v160, %v161
    %163 = vadd.xlane.f32.xlu0 %v162
    %v164 = vpop.xlane.xlu0 %163
    %v165 = vrot.slane %v164, 4
    %v166 = vadd.f32 %v164, %v165
    %v167 = vrot.slane %v166, 2
    %v168 = vadd.f32 %v166, %v167
    %v169 = vrot.slane %v168, 1
    %v170 = vadd.f32 %v168, %v169
    %s171 = vtos %v170
    %v172 = vmul.f32 %v112, %v125
    %v173 = vmul.f32 %v118, %v129
    %v174 = vsel %vm134, %v172, 0.0
    %v175 = vsel %vm134, %v173, 0.0
    %v176 = vadd.f32 %v174, %v175
    %177 = vadd.xlane.f32.xlu0 %v176
    %v178 = vpop.xlane.xlu0 %177
    %v179 = vrot.slane %v178, 4
    %v180 = vadd.f32 %v178, %v179
    %v181 = vrot.slane %v180, 2
    %v182 = vadd.f32 %v180, %v181
    %v183 = vrot.slane %v182, 1
    %v184 = vadd.f32 %v182, %v183
    %s185 = vtos %v184
    %v186 = vmul.f32 %v112, %v151
    %v187 = vmul.f32 %v118, %v155
    %v188 = vsel %vm134, %v186, 0.0
    %v189 = vsel %vm134, %v187, 0.0
    %v190 = vadd.f32 %v188, %v189
    %191 = vadd.xlane.f32.xlu0 %v190
    %v192 = vpop.xlane.xlu0 %191
    %v193 = vrot.slane %v192, 4
    %v194 = vadd.f32 %v192, %v193
    %v195 = vrot.slane %v194, 2
    %v196 = vadd.f32 %v194, %v195
    %v197 = vrot.slane %v196, 1
    %v198 = vadd.f32 %v196, %v197
    %s199 = vtos %v198
    %v200 = vlaneseq
    %v201 = vshrl.u32 %v200, 7
    %v202 = vlaneseq
    %v203 = vand.u32 %v202, 127
    %vm204 = vcmp.eq.s32.totalorder %v201, 0
    %vm205 = vcmp.eq.s32.totalorder %v203, 0
    %vm206 = vmand %vm204, %vm205
    %v207 = vstv %s94
    %v208 = vsel %vm206, %v207, 0.0
    %vm209 = vcmp.eq.s32.totalorder %v203, 1
    %vm210 = vmand %vm204, %vm209
    %v211 = vstv %s146
    %v212 = vsel %vm210, %v211, %v208
    %vm213 = vcmp.eq.s32.totalorder %v203, 2
    %vm214 = vmand %vm204, %vm213
    %v215 = vstv %s171
    %v216 = vsel %vm214, %v215, %v212
    %vm217 = vcmp.eq.s32.totalorder %v203, 3
    %vm218 = vmand %vm204, %vm217
    %v219 = vstv %s185
    %v220 = vsel %vm218, %v219, %v216
    %vm221 = vcmp.eq.s32.totalorder %v203, 4
    %vm222 = vmand %vm204, %vm221
    %v223 = vstv %s199
    %v224 = vsel %vm222, %v223, %v220
    %225 = vst [vmem:[#allocation8] sm:$0xff] %v224
    // Predicated region
    $region30: #{tpu_custom_call.1} parent=1 // pred_check
      _
    $region31: #{tpu_custom_call.1} parent=1 // pred_check_branch
      %227 = sbr.rel (0) target = $region33
    $region32: #{tpu_custom_call.1} parent=1 // pred_region
      %s229 = ssub.s32 128, 128
      %230 = vsyncadd [#allocation4], %s229
      %s232 = sshll.u32 [#allocation8], 4
      %s233 = int_to_ptr.vmem [resolvable:$true] %s232
      %235 = dma.vmem_to_hbm [thread:$0]  %s233, 128, %s4, [#allocation4]
    $region33: #{tpu_custom_call.1} parent=1 // pred_fallthru
      _
    // Predicated region
    $region34: #{tpu_custom_call.1} parent=1 // pred_check
      _
    $region35: #{tpu_custom_call.1} parent=1 // pred_check_branch
      %237 = sbr.rel (0) target = $region37
    $region36: #{tpu_custom_call.1} parent=1 // pred_region
      %238 = dma.done [#allocation4], 128
    $region37: #{tpu_custom_call.1} parent=1 // pred_fallthru
      _
    %239 = vsyncpa [#allocation3], 1
    %240 = vsyncpa [#allocation6], 1
    %241 = vsyncpa [#allocation4], 1

</llo_original>
